<compile_context>
chip_gen: v5e
topology: v5e:2x2
jax: 0.10.0
libtpu: 0.0.40
codegen_flags: <defaults>
</compile_context>

<pallas_src>
import functools
import math

import jax
import jax.numpy as jnp
from jax import lax
from jax.experimental import pallas as pl
from jax.experimental.pallas import tpu as pltpu


def _stn_rnn_kernel(pre_ref, whh_hbm_ref, out_ref, h_ref, w_ref, sem_ref,
                    *, k, tt):
    """Run `tt` STN_RNN steps for one (batch-chunk, time-chunk) grid point."""
    t = pl.program_id(1)

    @pl.when(t == 0)
    def _():
        # New batch chunk: load W_hh^T into its single-buffered VMEM home once
        # and reset the carried hidden state (module default: h = zeros).
        cp = pltpu.make_async_copy(whh_hbm_ref, w_ref, sem_ref)
        cp.start()
        cp.wait()
        h_ref[...] = jnp.zeros_like(h_ref)

    def step(i, h):
        cell = jnp.tanh(
            pre_ref[i]
            + jnp.dot(h, w_ref[...], preferred_element_type=jnp.float32))
        if k == 1.0:                 # static python float -> trace-time branch
            h_new = cell
        else:
            h_new = h + k * (cell - h)
        out_ref[i] = h_new.astype(out_ref.dtype)
        return h_new

    h_final = lax.fori_loop(0, tt, step, h_ref[...], unroll=True)
    h_ref[...] = h_final


def stn_rnn(x, w_ih, w_hh, b_ih, b_hh, *, os_factor=1.0, tt=8):
    """Forward pass of STN_RNN(torch.nn.RNNCell(tanh), os_factor) with h=None.

    x: (B, T, I).  Returns (states, h_last) exactly like the torch module
    (for RNNCell, states[..., :hidden] is the full state).
    """
    # TODO(synk): LSTMCell variant (state_size = 2*hidden) and a user-supplied
    # initial hidden state are not implemented; only RNNCell(tanh), h=None.
    B, T, I = x.shape
    H = w_hh.shape[0]
    k = 1.0 / float(os_factor)

    # ---- hoisted input projection (big-M parallel matmul, plain XLA) -------
    # pre[t, b, :] = x[b, t, :] @ W_ih^T + (b_ih + b_hh), emitted time-major.
    bias = (b_ih + b_hh).astype(jnp.float32)
    pre = jnp.einsum("bti,hi->tbh", x.astype(jnp.float32),
                     w_ih.astype(jnp.float32)) + bias            # (T, B, H)

    # ---- pad to TPU-friendly tiles ------------------------------------------
    h_pad = ((H + 127) // 128) * 128          # lane-dense output stores
    b_pad = ((B + 7) // 8) * 8                # full sublanes
    tt = max(1, min(tt, T))
    t_pad = ((T + tt - 1) // tt) * tt

    # Split batch into two chunks when possible so megacore parts can run the
    # two independent recurrences on separate TensorCores.
    if b_pad >= 16 and b_pad % 16 == 0:
        bb = b_pad // 2
    else:
        bb = b_pad
    nb = b_pad // bb
    nt = t_pad // tt

    pre_pad = jnp.pad(pre, ((0, t_pad - T), (0, b_pad - B), (0, h_pad - H)))
    whh_t = jnp.pad(jnp.transpose(w_hh).astype(jnp.float32),
                    ((0, h_pad - H), (0, h_pad - H)))            # (h_pad, h_pad)

    kernel = functools.partial(_stn_rnn_kernel, k=k, tt=tt)

    states_pad = pl.pallas_call(
        kernel,
        out_shape=jax.ShapeDtypeStruct((t_pad, b_pad, h_pad), jnp.float32),
        grid_spec=pltpu.PrefetchScalarGridSpec(
            num_scalar_prefetch=0,
            grid=(nb, nt),
            in_specs=[
                # precomputed input projection, streamed per (batch, time) chunk
                pl.BlockSpec((tt, bb, h_pad), lambda b, t: (t, b, 0)),
                # recurrent weight stays in HBM; copied once into VMEM scratch
                pl.BlockSpec(memory_space=pl.ANY),
            ],
            out_specs=pl.BlockSpec((tt, bb, h_pad), lambda b, t: (t, b, 0)),
            scratch_shapes=[
                pltpu.VMEM((bb, h_pad), jnp.float32),       # carried hidden state
                pltpu.VMEM((h_pad, h_pad), jnp.float32),    # resident W_hh^T
                pltpu.SemaphoreType.DMA(()),
            ],
        ),
        compiler_params=pltpu.CompilerParams(
            # batch chunks are independent (megacore-shardable); time is serial
            dimension_semantics=("parallel", "arbitrary")),
    )(pre_pad, whh_t)

    states = jnp.transpose(states_pad[:T, :B, :H], (1, 0, 2))    # (B, T, H)
    h_last = states[:, -1, :]
    return states, h_last


def reference(x, w_ih, w_hh, b_ih, b_hh, *, os_factor=1.0):
    """Pure-JAX mirror of STN_RNN.forward with an RNNCell(tanh), h=None."""
    B, T, I = x.shape
    H = w_hh.shape[0]
    k = 1.0 / float(os_factor)
    h = jnp.zeros((B, H), jnp.float32)
    outs = []
    for i in range(T):
        xi = x[:, i, :]
        cell = jnp.tanh(xi @ w_ih.T + b_ih + h @ w_hh.T + b_hh)
        h = h + k * (cell - h)          # h + k * (cell(x, h) - h)
        outs.append(h)
    states = jnp.stack(outs, axis=1)
    return states[..., :H], h


if __name__ == "__main__":
    B, T, I, H = 4, 8, 16, 32
    key = jax.random.PRNGKey(0)
    kx, k1, k2, k3, k4 = jax.random.split(key, 5)

    x = jax.random.normal(kx, (B, T, I), jnp.float32)
    bound = 1.0 / math.sqrt(H)   # torch.nn.RNNCell default init range
    w_ih = jax.random.uniform(k1, (H, I), jnp.float32, -bound, bound)
    w_hh = jax.random.uniform(k2, (H, H), jnp.float32, -bound, bound)
    b_ih = jax.random.uniform(k3, (H,), jnp.float32, -bound, bound)
    b_hh = jax.random.uniform(k4, (H,), jnp.float32, -bound, bound)

    ok = True
    for osf in (1.0, 1.5):
        states, h_last = stn_rnn(x, w_ih, w_hh, b_ih, b_hh, os_factor=osf)
        jax.block_until_ready((states, h_last))
        ref_states, ref_h = reference(x, w_ih, w_hh, b_ih, b_hh, os_factor=osf)
        ok &= states.shape == (B, T, H) and h_last.shape == (B, H)
        ok &= bool(jnp.allclose(states, ref_states, atol=2e-3, rtol=2e-3))
        ok &= bool(jnp.allclose(h_last, ref_h, atol=2e-3, rtol=2e-3))

    assert ok
    print("KERNEL_OK")
</pallas_src>

<mosaic_0001>
module attributes {stable_mosaic.version = 11 : i64} {
  func.func @_stn_rnn_kernel(%arg0: i32, %arg1: i32, %arg2: memref<8x8x128xf32, #tpu.memory_space<vmem>>, %arg3: memref<128x128xf32, #tpu.memory_space<any>>, %arg4: memref<8x8x128xf32, #tpu.memory_space<vmem>>, %arg5: memref<8x128xf32, #tpu.memory_space<vmem>>, %arg6: memref<128x128xf32, #tpu.memory_space<vmem>>, %arg7: memref<!tpu.dma_semaphore, #tpu.memory_space<semaphore_mem>>) attributes {dimension_semantics = [#tpu.dimension_semantics<parallel>, #tpu.dimension_semantics<arbitrary>], iteration_bounds = array<i64: 1, 1>, scalar_prefetch = 0 : i64, scratch_operands = 3 : i64, tpu.core_type = #tpu.core_type<tc>, window_params = [{transform_indices = @transform_0, window_bounds = array<i64: 8, 8, 128>}, {}, {transform_indices = @transform_2, window_bounds = array<i64: 8, 8, 128>}]} {
    %c0_i32 = arith.constant 0 : i32
    %0 = arith.cmpi eq, %arg1, %c0_i32 : i32
    %1 = arith.extui %0 : i1 to i32
    %c0_i32_0 = arith.constant 0 : i32
    %2 = arith.cmpi ne, %1, %c0_i32_0 : i32
    scf.if %2 {
      tpu.enqueue_dma source(%arg3 : memref<128x128xf32, #tpu.memory_space<any>>) target(%arg6 : memref<128x128xf32, #tpu.memory_space<vmem>>) target_semaphore(%arg7 : memref<!tpu.dma_semaphore, #tpu.memory_space<semaphore_mem>>)
      tpu.wait_dma2 semaphore(%arg7 : memref<!tpu.dma_semaphore, #tpu.memory_space<semaphore_mem>>) src(%arg3 : memref<128x128xf32, #tpu.memory_space<any>>) dst(%arg6 : memref<128x128xf32, #tpu.memory_space<vmem>>)
      %cst_60 = arith.constant 0.000000e+00 : f32
      %93 = vector.broadcast %cst_60 : f32 to vector<8x128xf32>
      %c0_61 = arith.constant 0 : index
      %c0_62 = arith.constant 0 : index
      %94 = vector.load %arg5[%c0_61, %c0_62] : memref<8x128xf32, #tpu.memory_space<vmem>>, vector<8x128xf32>
      tpu.vector_store %arg5[%c0_61, %c0_62], %93 {strides = array<i32>} : memref<8x128xf32, #tpu.memory_space<vmem>>, vector<8x128xf32>,
    } else {
    }
    %c0 = arith.constant 0 : index
    %c0_1 = arith.constant 0 : index
    %3 = vector.load %arg5[%c0, %c0_1] : memref<8x128xf32, #tpu.memory_space<vmem>>, vector<8x128xf32>
    %c0_i32_2 = arith.constant 0 : i32
    %4 = arith.index_cast %c0_i32_2 : i32 to index
    %c0_3 = arith.constant 0 : index
    %c0_4 = arith.constant 0 : index
    %5 = vector.load %arg2[%4, %c0_3, %c0_4] : memref<8x8x128xf32, #tpu.memory_space<vmem>>, vector<1x8x128xf32>
    %6 = vector.shape_cast %5 : vector<1x8x128xf32> to vector<8x128xf32>
    %c0_5 = arith.constant 0 : index
    %c0_6 = arith.constant 0 : index
    %7 = vector.load %arg6[%c0_5, %c0_6] : memref<128x128xf32, #tpu.memory_space<vmem>>, vector<128x128xf32>
    %cst = arith.constant dense<0.000000e+00> : vector<8x128xf32>
    %8 = tpu.matmul %3, %7, %cst {dimension_numbers = #tpu.dot_dimension_numbers<[1], [0], [0], [1], [0, 0, 1, 1], [], []>} : vector<8x128xf32>, vector<128x128xf32>, vector<8x128xf32> -> vector<8x128xf32>
    %9 = arith.addf %6, %8 : vector<8x128xf32>
    %10 = math.tanh %9 : vector<8x128xf32>
    %11 = arith.index_cast %c0_i32_2 : i32 to index
    %c0_7 = arith.constant 0 : index
    %c0_8 = arith.constant 0 : index
    %12 = vector.load %arg4[%11, %c0_7, %c0_8] : memref<8x8x128xf32, #tpu.memory_space<vmem>>, vector<1x8x128xf32>
    %13 = vector.shape_cast %12 : vector<1x8x128xf32> to vector<8x128xf32>
    %14 = vector.shape_cast %10 : vector<8x128xf32> to vector<1x8x128xf32>
    tpu.vector_store %arg4[%11, %c0_7, %c0_8], %14 {strides = array<i32>} : memref<8x8x128xf32, #tpu.memory_space<vmem>>, vector<1x8x128xf32>,
    %c1_i32 = arith.constant 1 : i32
    %15 = arith.index_cast %c1_i32 : i32 to index
    %c0_9 = arith.constant 0 : index
    %c0_10 = arith.constant 0 : index
    %16 = vector.load %arg2[%15, %c0_9, %c0_10] : memref<8x8x128xf32, #tpu.memory_space<vmem>>, vector<1x8x128xf32>
    %17 = vector.shape_cast %16 : vector<1x8x128xf32> to vector<8x128xf32>
    %c0_11 = arith.constant 0 : index
    %c0_12 = arith.constant 0 : index
    %18 = vector.load %arg6[%c0_11, %c0_12] : memref<128x128xf32, #tpu.memory_space<vmem>>, vector<128x128xf32>
    %cst_13 = arith.constant dense<0.000000e+00> : vector<8x128xf32>
    %19 = tpu.matmul %10, %18, %cst_13 {dimension_numbers = #tpu.dot_dimension_numbers<[1], [0], [0], [1], [0, 0, 1, 1], [], []>} : vector<8x128xf32>, vector<128x128xf32>, vector<8x128xf32> -> vector<8x128xf32>
    %20 = arith.addf %17, %19 : vector<8x128xf32>
    %21 = math.tanh %20 : vector<8x128xf32>
    %22 = arith.index_cast %c1_i32 : i32 to index
    %c0_14 = arith.constant 0 : index
    %c0_15 = arith.constant 0 : index
    %23 = vector.load %arg4[%22, %c0_14, %c0_15] : memref<8x8x128xf32, #tpu.memory_space<vmem>>, vector<1x8x128xf32>
    %24 = vector.shape_cast %23 : vector<1x8x128xf32> to vector<8x128xf32>
    %25 = vector.shape_cast %21 : vector<8x128xf32> to vector<1x8x128xf32>
    tpu.vector_store %arg4[%22, %c0_14, %c0_15], %25 {strides = array<i32>} : memref<8x8x128xf32, #tpu.memory_space<vmem>>, vector<1x8x128xf32>,
    %c2_i32 = arith.constant 2 : i32
    %26 = arith.index_cast %c2_i32 : i32 to index
    %c0_16 = arith.constant 0 : index
    %c0_17 = arith.constant 0 : index
    %27 = vector.load %arg2[%26, %c0_16, %c0_17] : memref<8x8x128xf32, #tpu.memory_space<vmem>>, vector<1x8x128xf32>
    %28 = vector.shape_cast %27 : vector<1x8x128xf32> to vector<8x128xf32>
    %c0_18 = arith.constant 0 : index
    %c0_19 = arith.constant 0 : index
    %29 = vector.load %arg6[%c0_18, %c0_19] : memref<128x128xf32, #tpu.memory_space<vmem>>, vector<128x128xf32>
    %cst_20 = arith.constant dense<0.000000e+00> : vector<8x128xf32>
    %30 = tpu.matmul %21, %29, %cst_20 {dimension_numbers = #tpu.dot_dimension_numbers<[1], [0], [0], [1], [0, 0, 1, 1], [], []>} : vector<8x128xf32>, vector<128x128xf32>, vector<8x128xf32> -> vector<8x128xf32>
    %31 = arith.addf %28, %30 : vector<8x128xf32>
    %32 = math.tanh %31 : vector<8x128xf32>
    %33 = arith.index_cast %c2_i32 : i32 to index
    %c0_21 = arith.constant 0 : index
    %c0_22 = arith.constant 0 : index
    %34 = vector.load %arg4[%33, %c0_21, %c0_22] : memref<8x8x128xf32, #tpu.memory_space<vmem>>, vector<1x8x128xf32>
    %35 = vector.shape_cast %34 : vector<1x8x128xf32> to vector<8x128xf32>
    %36 = vector.shape_cast %32 : vector<8x128xf32> to vector<1x8x128xf32>
    tpu.vector_store %arg4[%33, %c0_21, %c0_22], %36 {strides = array<i32>} : memref<8x8x128xf32, #tpu.memory_space<vmem>>, vector<1x8x128xf32>,
    %c3_i32 = arith.constant 3 : i32
    %37 = arith.index_cast %c3_i32 : i32 to index
    %c0_23 = arith.constant 0 : index
    %c0_24 = arith.constant 0 : index
    %38 = vector.load %arg2[%37, %c0_23, %c0_24] : memref<8x8x128xf32, #tpu.memory_space<vmem>>, vector<1x8x128xf32>
    %39 = vector.shape_cast %38 : vector<1x8x128xf32> to vector<8x128xf32>
    %c0_25 = arith.constant 0 : index
    %c0_26 = arith.constant 0 : index
    %40 = vector.load %arg6[%c0_25, %c0_26] : memref<128x128xf32, #tpu.memory_space<vmem>>, vector<128x128xf32>
    %cst_27 = arith.constant dense<0.000000e+00> : vector<8x128xf32>
    %41 = tpu.matmul %32, %40, %cst_27 {dimension_numbers = #tpu.dot_dimension_numbers<[1], [0], [0], [1], [0, 0, 1, 1], [], []>} : vector<8x128xf32>, vector<128x128xf32>, vector<8x128xf32> -> vector<8x128xf32>
    %42 = arith.addf %39, %41 : vector<8x128xf32>
    %43 = math.tanh %42 : vector<8x128xf32>
    %44 = arith.index_cast %c3_i32 : i32 to index
    %c0_28 = arith.constant 0 : index
    %c0_29 = arith.constant 0 : index
    %45 = vector.load %arg4[%44, %c0_28, %c0_29] : memref<8x8x128xf32, #tpu.memory_space<vmem>>, vector<1x8x128xf32>
    %46 = vector.shape_cast %45 : vector<1x8x128xf32> to vector<8x128xf32>
    %47 = vector.shape_cast %43 : vector<8x128xf32> to vector<1x8x128xf32>
    tpu.vector_store %arg4[%44, %c0_28, %c0_29], %47 {strides = array<i32>} : memref<8x8x128xf32, #tpu.memory_space<vmem>>, vector<1x8x128xf32>,
    %c4_i32 = arith.constant 4 : i32
    %48 = arith.index_cast %c4_i32 : i32 to index
    %c0_30 = arith.constant 0 : index
    %c0_31 = arith.constant 0 : index
    %49 = vector.load %arg2[%48, %c0_30, %c0_31] : memref<8x8x128xf32, #tpu.memory_space<vmem>>, vector<1x8x128xf32>
    %50 = vector.shape_cast %49 : vector<1x8x128xf32> to vector<8x128xf32>
    %c0_32 = arith.constant 0 : index
    %c0_33 = arith.constant 0 : index
    %51 = vector.load %arg6[%c0_32, %c0_33] : memref<128x128xf32, #tpu.memory_space<vmem>>, vector<128x128xf32>
    %cst_34 = arith.constant dense<0.000000e+00> : vector<8x128xf32>
    %52 = tpu.matmul %43, %51, %cst_34 {dimension_numbers = #tpu.dot_dimension_numbers<[1], [0], [0], [1], [0, 0, 1, 1], [], []>} : vector<8x128xf32>, vector<128x128xf32>, vector<8x128xf32> -> vector<8x128xf32>
    %53 = arith.addf %50, %52 : vector<8x128xf32>
    %54 = math.tanh %53 : vector<8x128xf32>
    %55 = arith.index_cast %c4_i32 : i32 to index
    %c0_35 = arith.constant 0 : index
    %c0_36 = arith.constant 0 : index
    %56 = vector.load %arg4[%55, %c0_35, %c0_36] : memref<8x8x128xf32, #tpu.memory_space<vmem>>, vector<1x8x128xf32>
    %57 = vector.shape_cast %56 : vector<1x8x128xf32> to vector<8x128xf32>
    %58 = vector.shape_cast %54 : vector<8x128xf32> to vector<1x8x128xf32>
    tpu.vector_store %arg4[%55, %c0_35, %c0_36], %58 {strides = array<i32>} : memref<8x8x128xf32, #tpu.memory_space<vmem>>, vector<1x8x128xf32>,
    %c5_i32 = arith.constant 5 : i32
    %59 = arith.index_cast %c5_i32 : i32 to index
    %c0_37 = arith.constant 0 : index
    %c0_38 = arith.constant 0 : index
    %60 = vector.load %arg2[%59, %c0_37, %c0_38] : memref<8x8x128xf32, #tpu.memory_space<vmem>>, vector<1x8x128xf32>
    %61 = vector.shape_cast %60 : vector<1x8x128xf32> to vector<8x128xf32>
    %c0_39 = arith.constant 0 : index
    %c0_40 = arith.constant 0 : index
    %62 = vector.load %arg6[%c0_39, %c0_40] : memref<128x128xf32, #tpu.memory_space<vmem>>, vector<128x128xf32>
    %cst_41 = arith.constant dense<0.000000e+00> : vector<8x128xf32>
    %63 = tpu.matmul %54, %62, %cst_41 {dimension_numbers = #tpu.dot_dimension_numbers<[1], [0], [0], [1], [0, 0, 1, 1], [], []>} : vector<8x128xf32>, vector<128x128xf32>, vector<8x128xf32> -> vector<8x128xf32>
    %64 = arith.addf %61, %63 : vector<8x128xf32>
    %65 = math.tanh %64 : vector<8x128xf32>
    %66 = arith.index_cast %c5_i32 : i32 to index
    %c0_42 = arith.constant 0 : index
    %c0_43 = arith.constant 0 : index
    %67 = vector.load %arg4[%66, %c0_42, %c0_43] : memref<8x8x128xf32, #tpu.memory_space<vmem>>, vector<1x8x128xf32>
    %68 = vector.shape_cast %67 : vector<1x8x128xf32> to vector<8x128xf32>
    %69 = vector.shape_cast %65 : vector<8x128xf32> to vector<1x8x128xf32>
    tpu.vector_store %arg4[%66, %c0_42, %c0_43], %69 {strides = array<i32>} : memref<8x8x128xf32, #tpu.memory_space<vmem>>, vector<1x8x128xf32>,
    %c6_i32 = arith.constant 6 : i32
    %70 = arith.index_cast %c6_i32 : i32 to index
    %c0_44 = arith.constant 0 : index
    %c0_45 = arith.constant 0 : index
    %71 = vector.load %arg2[%70, %c0_44, %c0_45] : memref<8x8x128xf32, #tpu.memory_space<vmem>>, vector<1x8x128xf32>
    %72 = vector.shape_cast %71 : vector<1x8x128xf32> to vector<8x128xf32>
    %c0_46 = arith.constant 0 : index
    %c0_47 = arith.constant 0 : index
    %73 = vector.load %arg6[%c0_46, %c0_47] : memref<128x128xf32, #tpu.memory_space<vmem>>, vector<128x128xf32>
    %cst_48 = arith.constant dense<0.000000e+00> : vector<8x128xf32>
    %74 = tpu.matmul %65, %73, %cst_48 {dimension_numbers = #tpu.dot_dimension_numbers<[1], [0], [0], [1], [0, 0, 1, 1], [], []>} : vector<8x128xf32>, vector<128x128xf32>, vector<8x128xf32> -> vector<8x128xf32>
    %75 = arith.addf %72, %74 : vector<8x128xf32>
    %76 = math.tanh %75 : vector<8x128xf32>
    %77 = arith.index_cast %c6_i32 : i32 to index
    %c0_49 = arith.constant 0 : index
    %c0_50 = arith.constant 0 : index
    %78 = vector.load %arg4[%77, %c0_49, %c0_50] : memref<8x8x128xf32, #tpu.memory_space<vmem>>, vector<1x8x128xf32>
    %79 = vector.shape_cast %78 : vector<1x8x128xf32> to vector<8x128xf32>
    %80 = vector.shape_cast %76 : vector<8x128xf32> to vector<1x8x128xf32>
    tpu.vector_store %arg4[%77, %c0_49, %c0_50], %80 {strides = array<i32>} : memref<8x8x128xf32, #tpu.memory_space<vmem>>, vector<1x8x128xf32>,
    %c7_i32 = arith.constant 7 : i32
    %81 = arith.index_cast %c7_i32 : i32 to index
    %c0_51 = arith.constant 0 : index
    %c0_52 = arith.constant 0 : index
    %82 = vector.load %arg2[%81, %c0_51, %c0_52] : memref<8x8x128xf32, #tpu.memory_space<vmem>>, vector<1x8x128xf32>
    %83 = vector.shape_cast %82 : vector<1x8x128xf32> to vector<8x128xf32>
    %c0_53 = arith.constant 0 : index
    %c0_54 = arith.constant 0 : index
    %84 = vector.load %arg6[%c0_53, %c0_54] : memref<128x128xf32, #tpu.memory_space<vmem>>, vector<128x128xf32>
    %cst_55 = arith.constant dense<0.000000e+00> : vector<8x128xf32>
    %85 = tpu.matmul %76, %84, %cst_55 {dimension_numbers = #tpu.dot_dimension_numbers<[1], [0], [0], [1], [0, 0, 1, 1], [], []>} : vector<8x128xf32>, vector<128x128xf32>, vector<8x128xf32> -> vector<8x128xf32>
    %86 = arith.addf %83, %85 : vector<8x128xf32>
    %87 = math.tanh %86 : vector<8x128xf32>
    %88 = arith.index_cast %c7_i32 : i32 to index
    %c0_56 = arith.constant 0 : index
    %c0_57 = arith.constant 0 : index
    %89 = vector.load %arg4[%88, %c0_56, %c0_57] : memref<8x8x128xf32, #tpu.memory_space<vmem>>, vector<1x8x128xf32>
    %90 = vector.shape_cast %89 : vector<1x8x128xf32> to vector<8x128xf32>
    %91 = vector.shape_cast %87 : vector<8x128xf32> to vector<1x8x128xf32>
    tpu.vector_store %arg4[%88, %c0_56, %c0_57], %91 {strides = array<i32>} : memref<8x8x128xf32, #tpu.memory_space<vmem>>, vector<1x8x128xf32>,
    %c8_i32 = arith.constant 8 : i32
    %c0_58 = arith.constant 0 : index
    %c0_59 = arith.constant 0 : index
    %92 = vector.load %arg5[%c0_58, %c0_59] : memref<8x128xf32, #tpu.memory_space<vmem>>, vector<8x128xf32>
    tpu.vector_store %arg5[%c0_58, %c0_59], %87 {strides = array<i32>} : memref<8x128xf32, #tpu.memory_space<vmem>>, vector<8x128xf32>,
    return
  }
  func.func @transform_0(%arg0: i32, %arg1: i32) -> (i32, i32, i32) {
    %c0_i32 = arith.constant 0 : i32
    %c0_i32_0 = arith.constant 0 : i32
    return %arg1, %arg0, %c0_i32 : i32, i32, i32
  }
  func.func @transform_2(%arg0: i32, %arg1: i32) -> (i32, i32, i32) {
    %c0_i32 = arith.constant 0 : i32
    %c0_i32_0 = arith.constant 0 : i32
    return %arg1, %arg0, %c0_i32 : i32, i32, i32
  }
}

</mosaic_0001>

<llo_original>
// kernel: tpu_custom_call.1
$region0: #{tpu_custom_call.1}
  #allocation0 [shape = 'u32[]', space=smem, size = 0x4, offset = 0x4, fixed_abs, tag = 'smem constant byte address 0x4 - core index']
  #allocation1 [shape = 'u32[72,128]{1,0:T(1,128)}', space=vmem, size = 0x9000, scoped, tag = 'internal scratch']
  #allocation2 [shape = 'f32[8,128]{1,0:T(8,128)}', space=vmem, size = 0x1000, scoped, tag = 'scratch operand']
  #allocation3 [shape = 'f32[128,128]{1,0:T(8,128)}', space=vmem, size = 0x10000, scoped, tag = 'scratch operand']
  #allocation4 [shape = 's32[1]{0}', space=sflag, size = 0x4, scoped, tag = 'scratch operand']
  #allocation9 [shape = 's32[]', space=sflag, size = 0x4, offset = 0, fixed_abs, tag = 'sflag constant byte address 0x0 - dummy sync flag']
  #allocation10 [shape = 's32[]', space=sflag, size = 0x4, offset = 0, fixed_abs, tag = 'sflag constant byte address 0x0 - dummy sync flag']
  #allocation11 [shape = 'u32[]', space=smem, size = 0x4, offset = 0x44, fixed_abs, tag = 'smem constant byte address 0x44 - assertion arg 0']
  #allocation12 [shape = 'u32[]', space=smem, size = 0x4, offset = 0x48, fixed_abs, tag = 'smem constant byte address 0x48 - assertion arg 1']
  %s0 = inlined_call_operand.hbm [shape: f32[8,8,128], index: 0, kind: input, shape index: {}]
  %s1 = inlined_call_operand.hbm [shape: f32[128,128], index: 1, kind: input, shape index: {}]
  %s2 = inlined_call_operand.hbm [shape: f32[8,8,128], index: 2, kind: output, shape index: {}]
  %s3 = sld [smem:[#allocation0]]
  $region26: #{tpu_custom_call.1} parent=0
    _
  %s5 = ssub.s32 1, %s3
  %s6 = scalar_select 0, %s5, %s3
  $region1: #{tpu_custom_call.1} parent=0
    #allocation5 [shape = 'u8[32768]{0}', space=vmem, size = 0x8000, scoped, tag = 'input window, operand 0, single buffered']
    #allocation6 [shape = 's32[1]{0}', space=sflag, size = 0x4, scoped, tag = 'scoped memory for tpu_custom_call.1']
    #allocation7 [shape = 's32[1]{0}', space=sflag, size = 0x4, scoped, tag = 'scoped memory for tpu_custom_call.1']
    #allocation8 [shape = 'u8[32768]{0}', space=vmem, size = 0x8000, scoped, tag = 'output window, operand 0, single buffered']
    %7 = vsyncpa [#allocation6], 0
    %8 = vsyncpa [#allocation7], 0
    // Predicated region
    $region2: #{tpu_custom_call.1} parent=1 // pred_check
      _
    $region3: #{tpu_custom_call.1} parent=1 // pred_check_branch
      %10 = sbr.rel (0) target = $region5
    $region4: #{tpu_custom_call.1} parent=1 // pred_region
      %12 = vsyncadd [#allocation6], 0
      %s13 = sshll.u32 %s0, 4
      %s14 = int_to_ptr.hbm [resolvable:$true] %s13
      %s15 = sshll.u32 [#allocation5], 4
      %s16 = int_to_ptr.vmem [resolvable:$true] %s15
      %21 = dma.hbm_to_vmem [thread:$0]  %s14, 1024, %s16, [#allocation6], 128, 128, 8
    $region5: #{tpu_custom_call.1} parent=1 // pred_fallthru
      _
    // Predicated region
    $region6: #{tpu_custom_call.1} parent=1 // pred_check
      _
    $region7: #{tpu_custom_call.1} parent=1 // pred_check_branch
      %23 = sbr.rel (0) target = $region9
    $region8: #{tpu_custom_call.1} parent=1 // pred_region
      %25 = dma.done [#allocation6], 1024
    $region9: #{tpu_custom_call.1} parent=1 // pred_fallthru
      _
    %p26 = scmp.eq.s32.totalorder 0, 0
    // Predicated region
    $region10: #{tpu_custom_call.1} parent=1 // pred_check
      %p27 = pneg %p26
    $region11: #{tpu_custom_call.1} parent=1 // pred_check_branch
      %29 = sbr.rel (%p27) target = $region13
    $region12: #{tpu_custom_call.1} parent=1 // pred_region
      // Predicated region
      $region14: #{tpu_custom_call.1} parent=12 // pred_check
        _
      $region15: #{tpu_custom_call.1} parent=12 // pred_check_branch
        %31 = sbr.rel target = $region17
      $region16: #{tpu_custom_call.1} parent=12 // pred_region
        %32 = sst [smem:[#allocation11]] [#allocation10]
        %33 = sst [smem:[#allocation12]] [#allocation9]
      $region17: #{tpu_custom_call.1} parent=12 // pred_fallthru
        _
      %35 = shalt.err (0)
      %s37 = sshll.u32 %s1, 4
      %s38 = int_to_ptr.hbm [resolvable:$true] %s37
      %s39 = sshll.u32 [#allocation3], 4
      %s40 = int_to_ptr.vmem [resolvable:$true] %s39
      %42 = dma.hbm_to_vmem [thread:$0]  %s38, 2048, %s40, [#allocation4]
      %s43 = smul.u32 128, 1
      %s44 = sshll.u32 %s43, 4
      %45 = dma.done [#allocation4], %s44
      %46 = vst [vmem:[#allocation2] sm:$0xff] 0.0
    $region13: #{tpu_custom_call.1} parent=1 // pred_fallthru
      _
    %v47 = vld [vmem:[#allocation2] sm:$0xff]
    %v48 = vld [vmem:[#allocation5] sm:$0xff]
    %v49 = vld [vmem:[#allocation3] sm:$0xff]
    %v50 = vld [vmem:[#allocation3 + $0x8] sm:$0xff]
    %v51 = vld [vmem:[#allocation3 + $0x10] sm:$0xff]
    %v52 = vld [vmem:[#allocation3 + $0x18] sm:$0xff]
    %v53 = vld [vmem:[#allocation3 + $0x20] sm:$0xff]
    %v54 = vld [vmem:[#allocation3 + $0x28] sm:$0xff]
    %v55 = vld [vmem:[#allocation3 + $0x30] sm:$0xff]
    %v56 = vld [vmem:[#allocation3 + $0x38] sm:$0xff]
    %v57 = vld [vmem:[#allocation3 + $0x40] sm:$0xff]
    %v58 = vld [vmem:[#allocation3 + $0x48] sm:$0xff]
    %v59 = vld [vmem:[#allocation3 + $0x50] sm:$0xff]
    %v60 = vld [vmem:[#allocation3 + $0x58] sm:$0xff]
    %v61 = vld [vmem:[#allocation3 + $0x60] sm:$0xff]
    %v62 = vld [vmem:[#allocation3 + $0x68] sm:$0xff]
    %v63 = vld [vmem:[#allocation3 + $0x70] sm:$0xff]
    %v64 = vld [vmem:[#allocation3 + $0x78] sm:$0xff]
    %65 = vmatpush.msra.mxu0 %v64
    %66 = vmatpush.msra.mxu0 %v63
    %67 = vmatpush.msra.mxu0 %v62
    %68 = vmatpush.msra.mxu0 %v61
    %69 = vmatpush.msra.mxu0 %v60
    %70 = vmatpush.msra.mxu0 %v59
    %71 = vmatpush.msra.mxu0 %v58
    %72 = vmatpush.msra.mxu0 %v57
    %73 = vmatpush.msra.mxu0 %v56
    %74 = vmatpush.msra.mxu0 %v55
    %75 = vmatpush.msra.mxu0 %v54
    %76 = vmatpush.msra.mxu0 %v53
    %77 = vmatpush.msra.mxu0 %v52
    %78 = vmatpush.msra.mxu0 %v51
    %79 = vmatpush.msra.mxu0 %v50
    %80 = vmatpush.msra.mxu0 %v49
    %81 = vmatmul.f32.gmra.mxu0 %v47
    %v82 = vpop.f32.mrf.mxu0
    %v83 = vadd.f32 0.0, %v82
    %84 = vdwg.mxu0
    %v85 = vadd.f32 %v48, %v83
    %v86 = vtanh.pop %v85
    %87 = vst [vmem:[#allocation8] sm:$0xff] %v86
    %s88 = scalar_lea.vmem [#allocation5], 8
    %v89 = vld [vmem:[%s88] sm:$0xff]
    %v90 = vld [vmem:[#allocation3] sm:$0xff]
    %v91 = vld [vmem:[#allocation3 + $0x8] sm:$0xff]
    %v92 = vld [vmem:[#allocation3 + $0x10] sm:$0xff]
    %v93 = vld [vmem:[#allocation3 + $0x18] sm:$0xff]
    %v94 = vld [vmem:[#allocation3 + $0x20] sm:$0xff]
    %v95 = vld [vmem:[#allocation3 + $0x28] sm:$0xff]
    %v96 = vld [vmem:[#allocation3 + $0x30] sm:$0xff]
    %v97 = vld [vmem:[#allocation3 + $0x38] sm:$0xff]
    %v98 = vld [vmem:[#allocation3 + $0x40] sm:$0xff]
    %v99 = vld [vmem:[#allocation3 + $0x48] sm:$0xff]
    %v100 = vld [vmem:[#allocation3 + $0x50] sm:$0xff]
    %v101 = vld [vmem:[#allocation3 + $0x58] sm:$0xff]
    %v102 = vld [vmem:[#allocation3 + $0x60] sm:$0xff]
    %v103 = vld [vmem:[#allocation3 + $0x68] sm:$0xff]
    %v104 = vld [vmem:[#allocation3 + $0x70] sm:$0xff]
    %v105 = vld [vmem:[#allocation3 + $0x78] sm:$0xff]
    %106 = vmatpush.msra.mxu0 %v105
    %107 = vmatpush.msra.mxu0 %v104
    %108 = vmatpush.msra.mxu0 %v103
    %109 = vmatpush.msra.mxu0 %v102
    %110 = vmatpush.msra.mxu0 %v101
    %111 = vmatpush.msra.mxu0 %v100
    %112 = vmatpush.msra.mxu0 %v99
    %113 = vmatpush.msra.mxu0 %v98
    %114 = vmatpush.msra.mxu0 %v97
    %115 = vmatpush.msra.mxu0 %v96
    %116 = vmatpush.msra.mxu0 %v95
    %117 = vmatpush.msra.mxu0 %v94
    %118 = vmatpush.msra.mxu0 %v93
    %119 = vmatpush.msra.mxu0 %v92
    %120 = vmatpush.msra.mxu0 %v91
    %121 = vmatpush.msra.mxu0 %v90
    %122 = vmatmul.f32.gmra.mxu0 %v86
    %v123 = vpop.f32.mrf.mxu0
    %v124 = vadd.f32 0.0, %v123
    %125 = vdwg.mxu0
    %v126 = vadd.f32 %v89, %v124
    %v127 = vtanh.pop %v126
    %s128 = scalar_lea.vmem [#allocation8], 8
    %129 = vst [vmem:[%s128] sm:$0xff] %v127
    %s130 = scalar_lea.vmem [#allocation5], 16
    %v131 = vld [vmem:[%s130] sm:$0xff]
    %v132 = vld [vmem:[#allocation3] sm:$0xff]
    %v133 = vld [vmem:[#allocation3 + $0x8] sm:$0xff]
    %v134 = vld [vmem:[#allocation3 + $0x10] sm:$0xff]
    %v135 = vld [vmem:[#allocation3 + $0x18] sm:$0xff]
    %v136 = vld [vmem:[#allocation3 + $0x20] sm:$0xff]
    %v137 = vld [vmem:[#allocation3 + $0x28] sm:$0xff]
    %v138 = vld [vmem:[#allocation3 + $0x30] sm:$0xff]
    %v139 = vld [vmem:[#allocation3 + $0x38] sm:$0xff]
    %v140 = vld [vmem:[#allocation3 + $0x40] sm:$0xff]
    %v141 = vld [vmem:[#allocation3 + $0x48] sm:$0xff]
    %v142 = vld [vmem:[#allocation3 + $0x50] sm:$0xff]
    %v143 = vld [vmem:[#allocation3 + $0x58] sm:$0xff]
    %v144 = vld [vmem:[#allocation3 + $0x60] sm:$0xff]
    %v145 = vld [vmem:[#allocation3 + $0x68] sm:$0xff]
    %v146 = vld [vmem:[#allocation3 + $0x70] sm:$0xff]
    %v147 = vld [vmem:[#allocation3 + $0x78] sm:$0xff]
    %148 = vmatpush.msra.mxu0 %v147
    %149 = vmatpush.msra.mxu0 %v146
    %150 = vmatpush.msra.mxu0 %v145
    %151 = vmatpush.msra.mxu0 %v144
    %152 = vmatpush.msra.mxu0 %v143
    %153 = vmatpush.msra.mxu0 %v142
    %154 = vmatpush.msra.mxu0 %v141
    %155 = vmatpush.msra.mxu0 %v140
    %156 = vmatpush.msra.mxu0 %v139
    %157 = vmatpush.msra.mxu0 %v138
    %158 = vmatpush.msra.mxu0 %v137
    %159 = vmatpush.msra.mxu0 %v136
    %160 = vmatpush.msra.mxu0 %v135
    %161 = vmatpush.msra.mxu0 %v134
    %162 = vmatpush.msra.mxu0 %v133
    %163 = vmatpush.msra.mxu0 %v132
    %164 = vmatmul.f32.gmra.mxu0 %v127
    %v165 = vpop.f32.mrf.mxu0
    %v166 = vadd.f32 0.0, %v165
    %167 = vdwg.mxu0
    %v168 = vadd.f32 %v131, %v166
    %v169 = vtanh.pop %v168
    %s170 = scalar_lea.vmem [#allocation8], 16
    %171 = vst [vmem:[%s170] sm:$0xff] %v169
    %s172 = scalar_lea.vmem [#allocation5], 24
    %v173 = vld [vmem:[%s172] sm:$0xff]
    %v174 = vld [vmem:[#allocation3] sm:$0xff]
    %v175 = vld [vmem:[#allocation3 + $0x8] sm:$0xff]
    %v176 = vld [vmem:[#allocation3 + $0x10] sm:$0xff]
    %v177 = vld [vmem:[#allocation3 + $0x18] sm:$0xff]
    %v178 = vld [vmem:[#allocation3 + $0x20] sm:$0xff]
    %v179 = vld [vmem:[#allocation3 + $0x28] sm:$0xff]
    %v180 = vld [vmem:[#allocation3 + $0x30] sm:$0xff]
    %v181 = vld [vmem:[#allocation3 + $0x38] sm:$0xff]
    %v182 = vld [vmem:[#allocation3 + $0x40] sm:$0xff]
    %v183 = vld [vmem:[#allocation3 + $0x48] sm:$0xff]
    %v184 = vld [vmem:[#allocation3 + $0x50] sm:$0xff]
    %v185 = vld [vmem:[#allocation3 + $0x58] sm:$0xff]
    %v186 = vld [vmem:[#allocation3 + $0x60] sm:$0xff]
    %v187 = vld [vmem:[#allocation3 + $0x68] sm:$0xff]
    %v188 = vld [vmem:[#allocation3 + $0x70] sm:$0xff]
    %v189 = vld [vmem:[#allocation3 + $0x78] sm:$0xff]
    %190 = vmatpush.msra.mxu0 %v189
    %191 = vmatpush.msra.mxu0 %v188
    %192 = vmatpush.msra.mxu0 %v187
    %193 = vmatpush.msra.mxu0 %v186
    %194 = vmatpush.msra.mxu0 %v185
    %195 = vmatpush.msra.mxu0 %v184
    %196 = vmatpush.msra.mxu0 %v183
    %197 = vmatpush.msra.mxu0 %v182
    %198 = vmatpush.msra.mxu0 %v181
    %199 = vmatpush.msra.mxu0 %v180
    %200 = vmatpush.msra.mxu0 %v179
    %201 = vmatpush.msra.mxu0 %v178
    %202 = vmatpush.msra.mxu0 %v177
    %203 = vmatpush.msra.mxu0 %v176
    %204 = vmatpush.msra.mxu0 %v175
    %205 = vmatpush.msra.mxu0 %v174
    %206 = vmatmul.f32.gmra.mxu0 %v169
    %v207 = vpop.f32.mrf.mxu0
    %v208 = vadd.f32 0.0, %v207
    %209 = vdwg.mxu0
    %v210 = vadd.f32 %v173, %v208
    %v211 = vtanh.pop %v210
    %s212 = scalar_lea.vmem [#allocation8], 24
    %213 = vst [vmem:[%s212] sm:$0xff] %v211
    %s214 = scalar_lea.vmem [#allocation5], 32
    %v215 = vld [vmem:[%s214] sm:$0xff]
    %v216 = vld [vmem:[#allocation3] sm:$0xff]
    %v217 = vld [vmem:[#allocation3 + $0x8] sm:$0xff]
    %v218 = vld [vmem:[#allocation3 + $0x10] sm:$0xff]
    %v219 = vld [vmem:[#allocation3 + $0x18] sm:$0xff]
    %v220 = vld [vmem:[#allocation3 + $0x20] sm:$0xff]
    %v221 = vld [vmem:[#allocation3 + $0x28] sm:$0xff]
    %v222 = vld [vmem:[#allocation3 + $0x30] sm:$0xff]
    %v223 = vld [vmem:[#allocation3 + $0x38] sm:$0xff]
    %v224 = vld [vmem:[#allocation3 + $0x40] sm:$0xff]
    %v225 = vld [vmem:[#allocation3 + $0x48] sm:$0xff]
    %v226 = vld [vmem:[#allocation3 + $0x50] sm:$0xff]
    %v227 = vld [vmem:[#allocation3 + $0x58] sm:$0xff]
    %v228 = vld [vmem:[#allocation3 + $0x60] sm:$0xff]
    %v229 = vld [vmem:[#allocation3 + $0x68] sm:$0xff]
    %v230 = vld [vmem:[#allocation3 + $0x70] sm:$0xff]
    %v231 = vld [vmem:[#allocation3 + $0x78] sm:$0xff]
    %232 = vmatpush.msra.mxu0 %v231
    %233 = vmatpush.msra.mxu0 %v230
    %234 = vmatpush.msra.mxu0 %v229
    %235 = vmatpush.msra.mxu0 %v228
    %236 = vmatpush.msra.mxu0 %v227
    %237 = vmatpush.msra.mxu0 %v226
    %238 = vmatpush.msra.mxu0 %v225
    %239 = vmatpush.msra.mxu0 %v224
    %240 = vmatpush.msra.mxu0 %v223
    %241 = vmatpush.msra.mxu0 %v222
    %242 = vmatpush.msra.mxu0 %v221
    %243 = vmatpush.msra.mxu0 %v220
    %244 = vmatpush.msra.mxu0 %v219
    %245 = vmatpush.msra.mxu0 %v218
    %246 = vmatpush.msra.mxu0 %v217
    %247 = vmatpush.msra.mxu0 %v216
    %248 = vmatmul.f32.gmra.mxu0 %v211
    %v249 = vpop.f32.mrf.mxu0
    %v250 = vadd.f32 0.0, %v249
    %251 = vdwg.mxu0
    %v252 = vadd.f32 %v215, %v250
    %v253 = vtanh.pop %v252
    %s254 = scalar_lea.vmem [#allocation8], 32
    %255 = vst [vmem:[%s254] sm:$0xff] %v253
    %s256 = scalar_lea.vmem [#allocation5], 40
    %v257 = vld [vmem:[%s256] sm:$0xff]
    %v258 = vld [vmem:[#allocation3] sm:$0xff]
    %v259 = vld [vmem:[#allocation3 + $0x8] sm:$0xff]
    %v260 = vld [vmem:[#allocation3 + $0x10] sm:$0xff]
    %v261 = vld [vmem:[#allocation3 + $0x18] sm:$0xff]
    %v262 = vld [vmem:[#allocation3 + $0x20] sm:$0xff]
    %v263 = vld [vmem:[#allocation3 + $0x28] sm:$0xff]
    %v264 = vld [vmem:[#allocation3 + $0x30] sm:$0xff]
    %v265 = vld [vmem:[#allocation3 + $0x38] sm:$0xff]
    %v266 = vld [vmem:[#allocation3 + $0x40] sm:$0xff]
    %v267 = vld [vmem:[#allocation3 + $0x48] sm:$0xff]
    %v268 = vld [vmem:[#allocation3 + $0x50] sm:$0xff]
    %v269 = vld [vmem:[#allocation3 + $0x58] sm:$0xff]
    %v270 = vld [vmem:[#allocation3 + $0x60] sm:$0xff]
    %v271 = vld [vmem:[#allocation3 + $0x68] sm:$0xff]
    %v272 = vld [vmem:[#allocation3 + $0x70] sm:$0xff]
    %v273 = vld [vmem:[#allocation3 + $0x78] sm:$0xff]
    %274 = vmatpush.msra.mxu0 %v273
    %275 = vmatpush.msra.mxu0 %v272
    %276 = vmatpush.msra.mxu0 %v271
    %277 = vmatpush.msra.mxu0 %v270
    %278 = vmatpush.msra.mxu0 %v269
    %279 = vmatpush.msra.mxu0 %v268
    %280 = vmatpush.msra.mxu0 %v267
    %281 = vmatpush.msra.mxu0 %v266
    %282 = vmatpush.msra.mxu0 %v265
    %283 = vmatpush.msra.mxu0 %v264
    %284 = vmatpush.msra.mxu0 %v263
    %285 = vmatpush.msra.mxu0 %v262
    %286 = vmatpush.msra.mxu0 %v261
    %287 = vmatpush.msra.mxu0 %v260
    %288 = vmatpush.msra.mxu0 %v259
    %289 = vmatpush.msra.mxu0 %v258
    %290 = vmatmul.f32.gmra.mxu0 %v253
    %v291 = vpop.f32.mrf.mxu0
    %v292 = vadd.f32 0.0, %v291
    %293 = vdwg.mxu0
    %v294 = vadd.f32 %v257, %v292
    %v295 = vtanh.pop %v294
    %s296 = scalar_lea.vmem [#allocation8], 40
    %297 = vst [vmem:[%s296] sm:$0xff] %v295
    %s298 = scalar_lea.vmem [#allocation5], 48
    %v299 = vld [vmem:[%s298] sm:$0xff]
    %v300 = vld [vmem:[#allocation3] sm:$0xff]
    %v301 = vld [vmem:[#allocation3 + $0x8] sm:$0xff]
    %v302 = vld [vmem:[#allocation3 + $0x10] sm:$0xff]
    %v303 = vld [vmem:[#allocation3 + $0x18] sm:$0xff]
    %v304 = vld [vmem:[#allocation3 + $0x20] sm:$0xff]
    %v305 = vld [vmem:[#allocation3 + $0x28] sm:$0xff]
    %v306 = vld [vmem:[#allocation3 + $0x30] sm:$0xff]
    %v307 = vld [vmem:[#allocation3 + $0x38] sm:$0xff]
    %v308 = vld [vmem:[#allocation3 + $0x40] sm:$0xff]
    %v309 = vld [vmem:[#allocation3 + $0x48] sm:$0xff]
    %v310 = vld [vmem:[#allocation3 + $0x50] sm:$0xff]
    %v311 = vld [vmem:[#allocation3 + $0x58] sm:$0xff]
    %v312 = vld [vmem:[#allocation3 + $0x60] sm:$0xff]
    %v313 = vld [vmem:[#allocation3 + $0x68] sm:$0xff]
    %v314 = vld [vmem:[#allocation3 + $0x70] sm:$0xff]
    %v315 = vld [vmem:[#allocation3 + $0x78] sm:$0xff]
    %316 = vmatpush.msra.mxu0 %v315
    %317 = vmatpush.msra.mxu0 %v314
    %318 = vmatpush.msra.mxu0 %v313
    %319 = vmatpush.msra.mxu0 %v312
    %320 = vmatpush.msra.mxu0 %v311
    %321 = vmatpush.msra.mxu0 %v310
    %322 = vmatpush.msra.mxu0 %v309
    %323 = vmatpush.msra.mxu0 %v308
    %324 = vmatpush.msra.mxu0 %v307
    %325 = vmatpush.msra.mxu0 %v306
    %326 = vmatpush.msra.mxu0 %v305
    %327 = vmatpush.msra.mxu0 %v304
    %328 = vmatpush.msra.mxu0 %v303
    %329 = vmatpush.msra.mxu0 %v302
    %330 = vmatpush.msra.mxu0 %v301
    %331 = vmatpush.msra.mxu0 %v300
    %332 = vmatmul.f32.gmra.mxu0 %v295
    %v333 = vpop.f32.mrf.mxu0
    %v334 = vadd.f32 0.0, %v333
    %335 = vdwg.mxu0
    %v336 = vadd.f32 %v299, %v334
    %v337 = vtanh.pop %v336
    %s338 = scalar_lea.vmem [#allocation8], 48
    %339 = vst [vmem:[%s338] sm:$0xff] %v337
    %s340 = scalar_lea.vmem [#allocation5], 56
    %v341 = vld [vmem:[%s340] sm:$0xff]
    %v342 = vld [vmem:[#allocation3] sm:$0xff]
    %v343 = vld [vmem:[#allocation3 + $0x8] sm:$0xff]
    %v344 = vld [vmem:[#allocation3 + $0x10] sm:$0xff]
    %v345 = vld [vmem:[#allocation3 + $0x18] sm:$0xff]
    %v346 = vld [vmem:[#allocation3 + $0x20] sm:$0xff]
    %v347 = vld [vmem:[#allocation3 + $0x28] sm:$0xff]
    %v348 = vld [vmem:[#allocation3 + $0x30] sm:$0xff]
    %v349 = vld [vmem:[#allocation3 + $0x38] sm:$0xff]
    %v350 = vld [vmem:[#allocation3 + $0x40] sm:$0xff]
    %v351 = vld [vmem:[#allocation3 + $0x48] sm:$0xff]
    %v352 = vld [vmem:[#allocation3 + $0x50] sm:$0xff]
    %v353 = vld [vmem:[#allocation3 + $0x58] sm:$0xff]
    %v354 = vld [vmem:[#allocation3 + $0x60] sm:$0xff]
    %v355 = vld [vmem:[#allocation3 + $0x68] sm:$0xff]
    %v356 = vld [vmem:[#allocation3 + $0x70] sm:$0xff]
    %v357 = vld [vmem:[#allocation3 + $0x78] sm:$0xff]
    %358 = vmatpush.msra.mxu0 %v357
    %359 = vmatpush.msra.mxu0 %v356
    %360 = vmatpush.msra.mxu0 %v355
    %361 = vmatpush.msra.mxu0 %v354
    %362 = vmatpush.msra.mxu0 %v353
    %363 = vmatpush.msra.mxu0 %v352
    %364 = vmatpush.msra.mxu0 %v351
    %365 = vmatpush.msra.mxu0 %v350
    %366 = vmatpush.msra.mxu0 %v349
    %367 = vmatpush.msra.mxu0 %v348
    %368 = vmatpush.msra.mxu0 %v347
    %369 = vmatpush.msra.mxu0 %v346
    %370 = vmatpush.msra.mxu0 %v345
    %371 = vmatpush.msra.mxu0 %v344
    %372 = vmatpush.msra.mxu0 %v343
    %373 = vmatpush.msra.mxu0 %v342
    %374 = vmatmul.f32.gmra.mxu0 %v337
    %v375 = vpop.f32.mrf.mxu0
    %v376 = vadd.f32 0.0, %v375
    %377 = vdwg.mxu0
    %v378 = vadd.f32 %v341, %v376
    %v379 = vtanh.pop %v378
    %s380 = scalar_lea.vmem [#allocation8], 56
    %381 = vst [vmem:[%s380] sm:$0xff] %v379
    %382 = vst [vmem:[#allocation2] sm:$0xff] %v379
    // Predicated region
    $region18: #{tpu_custom_call.1} parent=1 // pred_check
      _
    $region19: #{tpu_custom_call.1} parent=1 // pred_check_branch
      %384 = sbr.rel (0) target = $region21
    $region20: #{tpu_custom_call.1} parent=1 // pred_region
      %386 = vsyncadd [#allocation7], 0
      %s387 = sshll.u32 [#allocation8], 4
      %s388 = int_to_ptr.vmem [resolvable:$true] %s387
      %s389 = sshll.u32 %s2, 4
      %s390 = int_to_ptr.hbm [resolvable:$true] %s389
      %395 = dma.vmem_to_hbm [thread:$0]  %s388, 1024, %s390, [#allocation7], 128, 128, 8
    $region21: #{tpu_custom_call.1} parent=1 // pred_fallthru
      _
    // Predicated region
    $region22: #{tpu_custom_call.1} parent=1 // pred_check
      _
    $region23: #{tpu_custom_call.1} parent=1 // pred_check_branch
      %397 = sbr.rel (0) target = $region25
    $region24: #{tpu_custom_call.1} parent=1 // pred_region
      %399 = dma.done [#allocation7], 1024
    $region25: #{tpu_custom_call.1} parent=1 // pred_fallthru
      _
    %400 = vsyncpa [#allocation6], 1
    %401 = vsyncpa [#allocation7], 1
  %402 = vsyncmov [#allocation4]
  %s403 = vpop.sfrf %402
  %p404 = scmp.eq.s32.totalorder %s403, 0
  %p405 = pneg %p404
  %407 = shalt.err (%p405)

</llo_original>
